<compile_context>
chip_gen: v7x
topology: tpu7x:2x2x1
jax: 0.10.0
libtpu: 0.0.40
codegen_flags: <defaults>
</compile_context>

<pallas_src>
import jax
import jax.numpy as jnp
from jax.experimental import pallas as pl
from jax.experimental.pallas import tpu as pltpu

HIDDEN = 80          # matches self.hidden_layer_nodes in the PyTorch module
_LANE = 128          # vreg lane width (hidden dim padded to this)
_TB = 4096           # batch tile for the streaming (large-batch) path; multiple of 8


def _round_up(x, m):
    return (x + m - 1) // m * m


def _mlp_kernel(x_ref, w1_ref, b1_ref, w2_ref, b2_ref, o_ref):
    # Fused fc1 + ReLU + fc2.  Hidden dim is zero-padded to 128 (lane-dense for the
    # first matmul / ReLU); output stays at n_actions (unpadded HBM writeback).
    h = jnp.dot(x_ref[...], w1_ref[...],
                preferred_element_type=jnp.float32) + b1_ref[...]
    h = jnp.maximum(h, 0.0)                                   # ReLU on VPU
    o_ref[...] = jnp.dot(h, w2_ref[...],
                         preferred_element_type=jnp.float32) + b2_ref[...]


def prepare_params(w1, b1, w2, b2):
    """Zero-pad the hidden dim (80 -> 128) ONCE, outside the hot path.

    Zero padding is exact: padded hidden units are relu(0 + 0) = 0 and the
    corresponding W2 rows are zero, so the output is bit-identical.  The output
    (n_actions) axis is left unpadded so HBM writeback stays minimal.
    """
    in_dim, hid = w1.shape
    n_actions = w2.shape[1]
    hp = _round_up(hid, _LANE)
    w1p = jnp.zeros((in_dim, hp), jnp.float32).at[:, :hid].set(w1)
    b1p = jnp.zeros((1, hp), jnp.float32).at[0, :hid].set(b1)
    w2p = jnp.zeros((hp, n_actions), jnp.float32).at[:hid, :].set(w2)
    b2p = jnp.asarray(b2, jnp.float32).reshape(1, n_actions)
    return w1p, b1p, w2p, b2p


def mlp_forward(state, params, *, batch_tile=_TB):
    """state: (B, input_size) f32; params: output of prepare_params.

    Returns (B, n_actions) f32.
    """
    w1p, b1p, w2p, b2p = params
    B, in_dim = state.shape
    hp = w1p.shape[1]
    n_actions = w2p.shape[1]
    assert w1p.shape == (in_dim, hp)
    assert batch_tile % 8 == 0

    if B <= batch_tile:
        # Single-shot path: no grid, whole arrays resident in VMEM, no
        # pipelining prologue/epilogue or double buffering for a tiny launch.
        return pl.pallas_call(
            _mlp_kernel,
            out_shape=jax.ShapeDtypeStruct((B, n_actions), jnp.float32),
            in_specs=[pl.BlockSpec(memory_space=pltpu.MemorySpace.VMEM)] * 5,
            out_specs=pl.BlockSpec(memory_space=pltpu.MemorySpace.VMEM),
        )(state, w1p, b1p, w2p, b2p)

    # Streaming path for large RL batches: tile the batch dimension with a ragged
    # last block (Pallas masks out-of-bounds rows on store), keep the tiny padded
    # weights resident (block index (0,0) every step), parallel over TensorCores.
    # NOTE (v7x): for best 2-TC balance pick batch_tile so the step count is even.
    steps = pl.cdiv(B, batch_tile)
    return pl.pallas_call(
        _mlp_kernel,
        out_shape=jax.ShapeDtypeStruct((B, n_actions), jnp.float32),
        grid=(steps,),
        in_specs=[
            pl.BlockSpec((batch_tile, in_dim), lambda i: (i, 0)),
            pl.BlockSpec((in_dim, hp), lambda i: (0, 0)),
            pl.BlockSpec((1, hp), lambda i: (0, 0)),
            pl.BlockSpec((hp, n_actions), lambda i: (0, 0)),
            pl.BlockSpec((1, n_actions), lambda i: (0, 0)),
        ],
        out_specs=pl.BlockSpec((batch_tile, n_actions), lambda i: (i, 0)),
        compiler_params=pltpu.CompilerParams(
            dimension_semantics=("parallel",)),
    )(state, w1p, b1p, w2p, b2p)


def init_params(key, input_size, n_actions):
    """Deterministic init matching nn.Linear's default U(-1/sqrt(fan_in), 1/sqrt(fan_in))."""
    k1, k2, k3, k4 = jax.random.split(key, 4)
    bound1 = 1.0 / jnp.sqrt(jnp.float32(input_size))
    bound2 = 1.0 / jnp.sqrt(jnp.float32(HIDDEN))
    w1 = jax.random.uniform(k1, (input_size, HIDDEN), jnp.float32, -bound1, bound1)
    b1 = jax.random.uniform(k2, (HIDDEN,), jnp.float32, -bound1, bound1)
    w2 = jax.random.uniform(k3, (HIDDEN, n_actions), jnp.float32, -bound2, bound2)
    b2 = jax.random.uniform(k4, (n_actions,), jnp.float32, -bound2, bound2)
    return w1, b1, w2, b2


if __name__ == "__main__":
    input_size = 16
    n_actions = 4

    key = jax.random.PRNGKey(0)
    k_params, k_small, k_large = jax.random.split(key, 3)
    w1, b1, w2, b2 = init_params(k_params, input_size, n_actions)
    params = prepare_params(w1, b1, w2, b2)   # padded once, outside the hot path

    def ref_fn(x):
        return jnp.maximum(x @ w1 + b1, 0.0) @ w2 + b2

    # --- small batch (single-shot, no-grid path) ---
    batch = 8
    state = jax.random.normal(k_small, (batch, input_size), jnp.float32)
    out = jax.block_until_ready(mlp_forward(state, params))
    assert out.shape == (batch, n_actions)
    assert jnp.allclose(out, ref_fn(state), atol=1e-5, rtol=1e-5)

    # --- streaming path (batch-tiled parallel grid, ragged last block) ---
    # Small tile here just to exercise the path at small scale; default is _TB=4096.
    big_batch = 600
    big_state = jax.random.normal(k_large, (big_batch, input_size), jnp.float32)
    big_out = jax.block_until_ready(mlp_forward(big_state, params, batch_tile=256))
    assert big_out.shape == (big_batch, n_actions)
    assert jnp.allclose(big_out, ref_fn(big_state), atol=1e-4, rtol=1e-4)

    print("KERNEL_OK")
</pallas_src>

<mosaic_0001>
module attributes {stable_mosaic.version = 11 : i64} {
  func.func @_mlp_kernel(%arg0: memref<8x16xf32, #tpu.memory_space<vmem>>, %arg1: memref<16x128xf32, #tpu.memory_space<vmem>>, %arg2: memref<1x128xf32, #tpu.memory_space<vmem>>, %arg3: memref<128x4xf32, #tpu.memory_space<vmem>>, %arg4: memref<1x4xf32, #tpu.memory_space<vmem>>, %arg5: memref<8x4xf32, #tpu.memory_space<vmem>>) attributes {dimension_semantics = [], scalar_prefetch = 0 : i64, scratch_operands = 0 : i64, tpu.core_type = #tpu.core_type<tc>} {
    %c0 = arith.constant 0 : index
    %c0_0 = arith.constant 0 : index
    %0 = vector.load %arg0[%c0, %c0_0] : memref<8x16xf32, #tpu.memory_space<vmem>>, vector<8x16xf32>
    %c0_1 = arith.constant 0 : index
    %c0_2 = arith.constant 0 : index
    %1 = vector.load %arg1[%c0_1, %c0_2] : memref<16x128xf32, #tpu.memory_space<vmem>>, vector<16x128xf32>
    %cst = arith.constant dense<0.000000e+00> : vector<8x128xf32>
    %2 = tpu.matmul %0, %1, %cst {dimension_numbers = #tpu.dot_dimension_numbers<[1], [0], [0], [1], [0, 0, 1, 1], [], []>} : vector<8x16xf32>, vector<16x128xf32>, vector<8x128xf32> -> vector<8x128xf32>
    %c0_3 = arith.constant 0 : index
    %c0_4 = arith.constant 0 : index
    %3 = vector.load %arg2[%c0_3, %c0_4] : memref<1x128xf32, #tpu.memory_space<vmem>>, vector<1x128xf32>
    %4 = vector.broadcast %3 : vector<1x128xf32> to vector<8x128xf32>
    %5 = arith.addf %2, %4 : vector<8x128xf32>
    %cst_5 = arith.constant 0.000000e+00 : f32
    %6 = vector.broadcast %cst_5 : f32 to vector<8x128xf32>
    %7 = arith.maximumf %5, %6 : vector<8x128xf32>
    %c0_6 = arith.constant 0 : index
    %c0_7 = arith.constant 0 : index
    %8 = vector.load %arg3[%c0_6, %c0_7] : memref<128x4xf32, #tpu.memory_space<vmem>>, vector<128x4xf32>
    %cst_8 = arith.constant dense<0.000000e+00> : vector<8x4xf32>
    %9 = tpu.matmul %7, %8, %cst_8 {dimension_numbers = #tpu.dot_dimension_numbers<[1], [0], [0], [1], [0, 0, 1, 1], [], []>} : vector<8x128xf32>, vector<128x4xf32>, vector<8x4xf32> -> vector<8x4xf32>
    %c0_9 = arith.constant 0 : index
    %c0_10 = arith.constant 0 : index
    %10 = vector.load %arg4[%c0_9, %c0_10] : memref<1x4xf32, #tpu.memory_space<vmem>>, vector<1x4xf32>
    %11 = vector.broadcast %10 : vector<1x4xf32> to vector<8x4xf32>
    %12 = arith.addf %9, %11 : vector<8x4xf32>
    %c0_11 = arith.constant 0 : index
    %c0_12 = arith.constant 0 : index
    %13 = vector.load %arg5[%c0_11, %c0_12] : memref<8x4xf32, #tpu.memory_space<vmem>>, vector<8x4xf32>
    tpu.vector_store %arg5[%c0_11, %c0_12], %12 {strides = array<i32>} : memref<8x4xf32, #tpu.memory_space<vmem>>, vector<8x4xf32>,
    return
  }
}

</mosaic_0001>

<llo_original>
// kernel: tpu_custom_call.1
$region0: #{tpu_custom_call.1}
  #allocation0 [shape = 'u32[]', space=smem, size = 0x4, offset = 0x4, fixed_abs, tag = 'smem constant byte address 0x4 - core index']
  #allocation1 [shape = 'u32[144,128]{1,0:T(1,128)}', space=vmem, size = 0x12000, scoped, tag = 'internal scratch']
  %s0 = inlined_call_operand.vmem [shape: f32[8,16], index: 0, kind: input, shape index: {}]
  %s1 = inlined_call_operand.vmem [shape: f32[16,128], index: 1, kind: input, shape index: {}]
  %s2 = inlined_call_operand.vmem [shape: f32[1,128], index: 2, kind: input, shape index: {}]
  %s3 = inlined_call_operand.vmem [shape: f32[128,4], index: 3, kind: input, shape index: {}]
  %s4 = inlined_call_operand.vmem [shape: f32[1,4], index: 4, kind: input, shape index: {}]
  %s5 = inlined_call_operand.vmem [shape: f32[8,4], index: 5, kind: output, shape index: {}]
  %s6 = sld [smem:[#allocation0]]
  $region30: #{tpu_custom_call.1} parent=0
    _
  %s8 = ssub.s32 1, %s6
  %s9 = scalar_select 0, %s8, %s6
  // Predicated region
  $region2: #{tpu_custom_call.1} parent=0 // pred_check
    _
  $region3: #{tpu_custom_call.1} parent=0 // pred_check_branch
    %11 = sbr.rel (0) target = $region5
  $region4: #{tpu_custom_call.1} parent=0 // pred_region
    _
  $region5: #{tpu_custom_call.1} parent=0 // pred_fallthru
    _
  // Predicated region
  $region6: #{tpu_custom_call.1} parent=0 // pred_check
    _
  $region7: #{tpu_custom_call.1} parent=0 // pred_check_branch
    %13 = sbr.rel (0) target = $region9
  $region8: #{tpu_custom_call.1} parent=0 // pred_region
    _
  $region9: #{tpu_custom_call.1} parent=0 // pred_fallthru
    _
  // Predicated region
  $region10: #{tpu_custom_call.1} parent=0 // pred_check
    _
  $region11: #{tpu_custom_call.1} parent=0 // pred_check_branch
    %15 = sbr.rel (0) target = $region13
  $region12: #{tpu_custom_call.1} parent=0 // pred_region
    _
  $region13: #{tpu_custom_call.1} parent=0 // pred_fallthru
    _
  // Predicated region
  $region14: #{tpu_custom_call.1} parent=0 // pred_check
    _
  $region15: #{tpu_custom_call.1} parent=0 // pred_check_branch
    %17 = sbr.rel (0) target = $region17
  $region16: #{tpu_custom_call.1} parent=0 // pred_region
    _
  $region17: #{tpu_custom_call.1} parent=0 // pred_fallthru
    _
  // Predicated region
  $region18: #{tpu_custom_call.1} parent=0 // pred_check
    _
  $region19: #{tpu_custom_call.1} parent=0 // pred_check_branch
    %19 = sbr.rel (0) target = $region21
  $region20: #{tpu_custom_call.1} parent=0 // pred_region
    _
  $region21: #{tpu_custom_call.1} parent=0 // pred_fallthru
    _
  %v20 = vld [vmem:[%s0] sm:$0xff]
  %v21 = vld [vmem:[%s1] sm:$0xff]
  %v22 = vld [vmem:[%s1 + $0x8] sm:$0xff]
  %v23 = vld [vmem:[%s2] sm:$0x1]
  %v25 = vlaneseq
  %v26 = vshrl.u32 %v25, 7
  %v27 = vsub.s32 0, %v26
  %v28 = vrot.slane %v23, %v27
  %vm30 = vcmask 130048
  %v32 = vsel %vm30, %v20, 0
  %34 = vmatprep.subr.mxu0 0.0
  %35 = vmatpush1.msra.mxu0 %v21
  %36 = vmatprep.subr.mxu0 0.0
  %37 = vmatpush1.msra.mxu0 %v22
  %38 = vmatprep.subr.mxu0 0.0
  %39 = vmatpush1.msra.mxu0 0.0
  %40 = vmatprep.subr.mxu0 0.0
  %41 = vmatpush1.msra.mxu0 0.0
  %42 = vmatprep.subr.mxu0 0.0
  %43 = vmatpush1.msra.mxu0 0.0
  %44 = vmatprep.subr.mxu0 0.0
  %45 = vmatpush1.msra.mxu0 0.0
  %46 = vmatprep.subr.mxu0 0.0
  %47 = vmatpush1.msra.mxu0 0.0
  %48 = vmatprep.subr.mxu0 0.0
  %49 = vmatpush1.msra.mxu0 0.0
  %50 = vmatprep.subr.mxu0 0.0
  %51 = vmatpush1.msra.mxu0 0.0
  %52 = vmatprep.subr.mxu0 0.0
  %53 = vmatpush1.msra.mxu0 0.0
  %54 = vmatprep.subr.mxu0 0.0
  %55 = vmatpush1.msra.mxu0 0.0
  %56 = vmatprep.subr.mxu0 0.0
  %57 = vmatpush1.msra.mxu0 0.0
  %58 = vmatprep.subr.mxu0 0.0
  %59 = vmatpush1.msra.mxu0 0.0
  %60 = vmatprep.subr.mxu0 0.0
  %61 = vmatpush1.msra.mxu0 0.0
  %62 = vmatprep.subr.mxu0 0.0
  %63 = vmatpush1.msra.mxu0 0.0
  %64 = vmatprep.subr.mxu0 0.0
  %65 = vmatpush1.msra.mxu0 0.0
  %66 = vmatprep.subr.mxu0 0.0
  %67 = vmatpush1.msra.mxu0 0.0
  %68 = vmatprep.subr.mxu0 0.0
  %69 = vmatpush1.msra.mxu0 0.0
  %70 = vmatprep.subr.mxu0 0.0
  %71 = vmatpush1.msra.mxu0 0.0
  %72 = vmatprep.subr.mxu0 0.0
  %73 = vmatpush1.msra.mxu0 0.0
  %74 = vmatprep.subr.mxu0 0.0
  %75 = vmatpush1.msra.mxu0 0.0
  %76 = vmatprep.subr.mxu0 0.0
  %77 = vmatpush1.msra.mxu0 0.0
  %78 = vmatprep.subr.mxu0 0.0
  %79 = vmatpush1.msra.mxu0 0.0
  %80 = vmatprep.subr.mxu0 0.0
  %81 = vmatpush1.msra.mxu0 0.0
  %82 = vmatprep.subr.mxu0 0.0
  %83 = vmatpush1.msra.mxu0 0.0
  %84 = vmatprep.subr.mxu0 0.0
  %85 = vmatpush1.msra.mxu0 0.0
  %86 = vmatprep.subr.mxu0 0.0
  %87 = vmatpush1.msra.mxu0 0.0
  %88 = vmatprep.subr.mxu0 0.0
  %89 = vmatpush1.msra.mxu0 0.0
  %90 = vmatprep.subr.mxu0 0.0
  %91 = vmatpush1.msra.mxu0 0.0
  %92 = vmatprep.subr.mxu0 0.0
  %93 = vmatpush1.msra.mxu0 0.0
  %94 = vmatprep.subr.mxu0 0.0
  %95 = vmatpush1.msra.mxu0 0.0
  %96 = vmatprep.subr.mxu0 0.0
  %97 = vmatpush1.msra.mxu0 0.0
  %98 = vmatprep.mubr.f32.mxu0 0.0
  %99 = vmatmul.mubr.f32.gmra.mrb[0].mxu0 %v32
  %v100 = vpop.f32.mrb[0].mxu0
  %v101 = vadd.f32 %v28, %v100
  %v102 = vpop.f32.mrb[0].mxu0
  %103 = vdwg.mxu0
  %v104 = vmax.f32 %v101, 0.0
  %v105 = vld [vmem:[%s3] sm:$0xff]
  %v106 = vld [vmem:[%s3 + $0x8] sm:$0xff]
  %v107 = vld [vmem:[%s3 + $0x10] sm:$0xff]
  %v108 = vld [vmem:[%s3 + $0x18] sm:$0xff]
  %v109 = vld [vmem:[%s3 + $0x20] sm:$0xff]
  %v110 = vld [vmem:[%s3 + $0x28] sm:$0xff]
  %v111 = vld [vmem:[%s3 + $0x30] sm:$0xff]
  %v112 = vld [vmem:[%s3 + $0x38] sm:$0xff]
  %v113 = vld [vmem:[%s3 + $0x40] sm:$0xff]
  %v114 = vld [vmem:[%s3 + $0x48] sm:$0xff]
  %v115 = vld [vmem:[%s3 + $0x50] sm:$0xff]
  %v116 = vld [vmem:[%s3 + $0x58] sm:$0xff]
  %v117 = vld [vmem:[%s3 + $0x60] sm:$0xff]
  %v118 = vld [vmem:[%s3 + $0x68] sm:$0xff]
  %v119 = vld [vmem:[%s3 + $0x70] sm:$0xff]
  %v120 = vld [vmem:[%s3 + $0x78] sm:$0xff]
  %v121 = vld [vmem:[%s4] sm:$0x1]
  %v123 = vlaneseq
  %v124 = vshrl.u32 %v123, 7
  %v125 = vsub.s32 0, %v124
  %v126 = vrot.slane %v121, %v125
  %128 = vmatprep.subr.mxu0 0.0
  %129 = vmatpush1.msra.mxu0 %v105
  %130 = vmatprep.subr.mxu0 0.0
  %131 = vmatpush1.msra.mxu0 %v106
  %132 = vmatprep.subr.mxu0 0.0
  %133 = vmatpush1.msra.mxu0 %v107
  %134 = vmatprep.subr.mxu0 0.0
  %135 = vmatpush1.msra.mxu0 %v108
  %136 = vmatprep.subr.mxu0 0.0
  %137 = vmatpush1.msra.mxu0 %v109
  %138 = vmatprep.subr.mxu0 0.0
  %139 = vmatpush1.msra.mxu0 %v110
  %140 = vmatprep.subr.mxu0 0.0
  %141 = vmatpush1.msra.mxu0 %v111
  %142 = vmatprep.subr.mxu0 0.0
  %143 = vmatpush1.msra.mxu0 %v112
  %144 = vmatprep.subr.mxu0 0.0
  %145 = vmatpush1.msra.mxu0 %v113
  %146 = vmatprep.subr.mxu0 0.0
  %147 = vmatpush1.msra.mxu0 %v114
  %148 = vmatprep.subr.mxu0 0.0
  %149 = vmatpush1.msra.mxu0 %v115
  %150 = vmatprep.subr.mxu0 0.0
  %151 = vmatpush1.msra.mxu0 %v116
  %152 = vmatprep.subr.mxu0 0.0
  %153 = vmatpush1.msra.mxu0 %v117
  %154 = vmatprep.subr.mxu0 0.0
  %155 = vmatpush1.msra.mxu0 %v118
  %156 = vmatprep.subr.mxu0 0.0
  %157 = vmatpush1.msra.mxu0 %v119
  %158 = vmatprep.subr.mxu0 0.0
  %159 = vmatpush1.msra.mxu0 %v120
  %160 = vmatprep.subr.mxu0 0.0
  %161 = vmatpush1.msra.mxu0 0.0
  %162 = vmatprep.subr.mxu0 0.0
  %163 = vmatpush1.msra.mxu0 0.0
  %164 = vmatprep.subr.mxu0 0.0
  %165 = vmatpush1.msra.mxu0 0.0
  %166 = vmatprep.subr.mxu0 0.0
  %167 = vmatpush1.msra.mxu0 0.0
  %168 = vmatprep.subr.mxu0 0.0
  %169 = vmatpush1.msra.mxu0 0.0
  %170 = vmatprep.subr.mxu0 0.0
  %171 = vmatpush1.msra.mxu0 0.0
  %172 = vmatprep.subr.mxu0 0.0
  %173 = vmatpush1.msra.mxu0 0.0
  %174 = vmatprep.subr.mxu0 0.0
  %175 = vmatpush1.msra.mxu0 0.0
  %176 = vmatprep.subr.mxu0 0.0
  %177 = vmatpush1.msra.mxu0 0.0
  %178 = vmatprep.subr.mxu0 0.0
  %179 = vmatpush1.msra.mxu0 0.0
  %180 = vmatprep.subr.mxu0 0.0
  %181 = vmatpush1.msra.mxu0 0.0
  %182 = vmatprep.subr.mxu0 0.0
  %183 = vmatpush1.msra.mxu0 0.0
  %184 = vmatprep.subr.mxu0 0.0
  %185 = vmatpush1.msra.mxu0 0.0
  %186 = vmatprep.subr.mxu0 0.0
  %187 = vmatpush1.msra.mxu0 0.0
  %188 = vmatprep.subr.mxu0 0.0
  %189 = vmatpush1.msra.mxu0 0.0
  %190 = vmatprep.subr.mxu0 0.0
  %191 = vmatpush1.msra.mxu0 0.0
  %192 = vmatprep.mubr.f32.mxu0 0.0
  %193 = vmatmul.mubr.f32.gmra.mrb[0].mxu0 %v104
  %v194 = vpop.f32.mrb[0].mxu0
  %v195 = vadd.f32 %v126, %v194
  %v196 = vpop.f32.mrb[0].mxu0
  %197 = vdwg.mxu0
  %vm198 = vcmask 31744
  %199 = vst.msk [vmem:[%s5] sm:$0xff] %vm198, %v195
  // Predicated region
  $region22: #{tpu_custom_call.1} parent=0 // pred_check
    _
  $region23: #{tpu_custom_call.1} parent=0 // pred_check_branch
    %201 = sbr.rel (0) target = $region25
  $region24: #{tpu_custom_call.1} parent=0 // pred_region
    _
  $region25: #{tpu_custom_call.1} parent=0 // pred_fallthru
    _
  // Predicated region
  $region26: #{tpu_custom_call.1} parent=0 // pred_check
    _
  $region27: #{tpu_custom_call.1} parent=0 // pred_check_branch
    %203 = sbr.rel (0) target = $region29
  $region28: #{tpu_custom_call.1} parent=0 // pred_region
    _
  $region29: #{tpu_custom_call.1} parent=0 // pred_fallthru
    _

</llo_original>
